<compile_context>
chip_gen: v5e
topology: v5e:2x2
jax: 0.10.0
libtpu: 0.0.40
codegen_flags: <defaults>
</compile_context>

<pallas_src>
import jax
import jax.numpy as jnp
from jax.experimental import pallas as pl
from jax.experimental.pallas import tpu as pltpu


def _round_up(v, m):
    return ((v + m - 1) // m) * m


# --------------------------------------------------------------------------- #
# Kernels
# --------------------------------------------------------------------------- #
def _edge_kernel_identity(idx_j_ref, x_ref, w_ref, b_ref, o_ref, uv_ref):
    """Default ViG path: edge_index[1] is the identity (center == own node)."""
    t = pl.program_id(1)

    # Per-batch node transform, computed once per batch (node tile 0):
    #   uv = [W1 - W2 ; W2] @ x_b   -> (2*Cout_p, N_p), stored bf16.
    @pl.when(t == 0)
    def _():
        uv_ref[...] = jnp.dot(
            w_ref[...], x_ref[0],
            preferred_element_type=jnp.float32).astype(jnp.bfloat16)

    co2, n_pad = uv_ref.shape
    co_pad = co2 // 2
    tn = o_ref.shape[2]
    k_nbrs = idx_j_ref.shape[1]

    # Neighbor transform (bottom half of the stacked scratch), bf16 MXU operand.
    vt = uv_ref[co_pad:co2, :]                                    # (Cout_p, N_p)
    node_ids = jax.lax.broadcasted_iota(jnp.int32, (n_pad, tn), 0)

    def body(k, acc):
        row_j = idx_j_ref[0, pl.ds(k, 1), :]                      # (1, TN) int32
        oh_j = (node_ids == row_j).astype(jnp.bfloat16)           # (N_p, TN)
        pre = jnp.dot(vt, oh_j, preferred_element_type=jnp.float32)
        return jnp.maximum(acc, pre)

    acc0 = jnp.full((co_pad, tn), -jnp.inf, dtype=jnp.float32)
    acc = jax.lax.fori_loop(0, k_nbrs, body, acc0, unroll=True)

    # Center contribution: identity gather == static slice of the cached ut.
    col0 = pl.multiple_of(t * tn, 128)
    ut_tile = uv_ref[0:co_pad, pl.ds(col0, tn)].astype(jnp.float32)

    # Bias hoisted out of the K loop; ReLU(max_k(.)) == max_k(ReLU(.)).
    o_ref[0] = jnp.maximum(acc + ut_tile + b_ref[...], 0.0).astype(o_ref.dtype)


def _edge_kernel_general(idx_i_ref, idx_j_ref, x_ref, w_ref, b_ref, o_ref,
                         uv_ref):
    """General path: arbitrary center indices (edge_index[1])."""
    t = pl.program_id(1)

    @pl.when(t == 0)
    def _():
        uv_ref[...] = jnp.dot(
            w_ref[...], x_ref[0],
            preferred_element_type=jnp.float32).astype(jnp.bfloat16)

    co2, n_pad = uv_ref.shape
    co_pad = co2 // 2
    tn = o_ref.shape[2]
    k_nbrs = idx_j_ref.shape[1]

    ut = uv_ref[0:co_pad, :]                                      # (Cout_p, N_p)
    vt = uv_ref[co_pad:co2, :]
    node_ids = jax.lax.broadcasted_iota(jnp.int32, (n_pad, tn), 0)

    def body(k, acc):
        row_i = idx_i_ref[0, pl.ds(k, 1), :]
        row_j = idx_j_ref[0, pl.ds(k, 1), :]
        oh_i = (node_ids == row_i).astype(jnp.bfloat16)
        oh_j = (node_ids == row_j).astype(jnp.bfloat16)
        pre = (jnp.dot(ut, oh_i, preferred_element_type=jnp.float32)
               + jnp.dot(vt, oh_j, preferred_element_type=jnp.float32))
        return jnp.maximum(acc, pre)

    acc0 = jnp.full((co_pad, tn), -jnp.inf, dtype=jnp.float32)
    acc = jax.lax.fori_loop(0, k_nbrs, body, acc0, unroll=True)

    o_ref[0] = jnp.maximum(acc + b_ref[...], 0.0).astype(o_ref.dtype)


# --------------------------------------------------------------------------- #
# Wrapper
# --------------------------------------------------------------------------- #
def _center_indices_are_identity(center_idx):
    """True iff edge_index[1][b, n, k] == n for all entries (concrete only)."""
    try:
        n = center_idx.shape[1]
        expect = jnp.arange(n, dtype=jnp.int32)[None, :, None]
        return bool(jnp.all(center_idx.astype(jnp.int32) == expect))
    except Exception:
        return False  # traced / unknown -> use the general (always-correct) path


def graph_conv2d_edge_forward(x_nchw, edge_index, weight, bias, *,
                              node_tile=256, center_is_identity=None):
    """
    x_nchw:     (B, C, N, 1)     float32 node features
    edge_index: (2, B, N, K)     int32; [0] = neighbor idx, [1] = center idx
    weight:     (Cout, 2C, 1, 1) float32  (Conv2d 1x1 over cat([x_i, x_j - x_i]))
    bias:       (Cout,)          float32
    returns:    (B, Cout, N, 1)  float32
    """
    B, C, N, last = x_nchw.shape
    assert last == 1, "EdgeConv2d expects trailing spatial dim of size 1"
    two, Bi, Ni, K = edge_index.shape
    assert two == 2 and Bi == B and Ni == N
    Cout = weight.shape[0]
    assert weight.shape[1] == 2 * C

    if center_is_identity is None:
        center_is_identity = _center_indices_are_identity(edge_index[1])

    # Factor the conv: W @ [x_i ; x_j - x_i] = (W1 - W2) @ x_i + W2 @ x_j
    w2d = weight.reshape(Cout, 2 * C)
    w1, w2 = w2d[:, :C], w2d[:, C:]

    # --- padding / tiling ----------------------------------------------------
    c_p = _round_up(C, 8)                        # sublane-aligned channels
    co_p = _round_up(Cout, 8)
    if N <= node_tile:
        tn = _round_up(N, 128)                   # lane-dense even for small N
        n_p = tn
    else:
        tn = _round_up(node_tile, 128)
        n_p = _round_up(N, tn)
    n_tiles = n_p // tn

    # x streamed as bf16 (largest input; halves HBM->VMEM bytes).
    xs = x_nchw[..., 0].astype(jnp.bfloat16)                      # (B, C, N)
    xs = jnp.pad(xs, ((0, 0), (0, c_p - C), (0, n_p - N)))

    # Stacked bf16 weights: [W1 - W2 ; W2] -> one MXU matmul per batch.
    wd = jnp.pad(w1 - w2, ((0, co_p - Cout), (0, c_p - C)))
    wj = jnp.pad(w2, ((0, co_p - Cout), (0, c_p - C)))
    w_stack = jnp.concatenate([wd, wj], axis=0).astype(jnp.bfloat16)

    b_col = jnp.pad(bias.astype(jnp.float32).reshape(Cout, 1),
                    ((0, co_p - Cout), (0, 0)))

    # edge_index -> (B, K, N) per role, padded along nodes (pad index 0 is a
    # valid node; padded output columns are discarded below).
    idx_j = jnp.pad(jnp.transpose(edge_index[0], (0, 2, 1)).astype(jnp.int32),
                    ((0, 0), (0, 0), (0, n_p - N)))

    if center_is_identity:
        kernel = _edge_kernel_identity
        inputs = (idx_j, xs, w_stack, b_col)
        in_specs = [
            pl.BlockSpec((1, K, tn), lambda b, t: (b, 0, t)),       # idx_j
            pl.BlockSpec((1, c_p, n_p), lambda b, t: (b, 0, 0)),    # x (full nodes)
            pl.BlockSpec((2 * co_p, c_p), lambda b, t: (0, 0)),     # stacked W
            pl.BlockSpec((co_p, 1), lambda b, t: (0, 0)),           # bias
        ]
        n_idx_inputs, gather_dots = 1, 1
    else:
        idx_i = jnp.pad(jnp.transpose(edge_index[1], (0, 2, 1)).astype(jnp.int32),
                        ((0, 0), (0, 0), (0, n_p - N)))
        kernel = _edge_kernel_general
        inputs = (idx_i, idx_j, xs, w_stack, b_col)
        in_specs = [
            pl.BlockSpec((1, K, tn), lambda b, t: (b, 0, t)),       # idx_i
            pl.BlockSpec((1, K, tn), lambda b, t: (b, 0, t)),       # idx_j
            pl.BlockSpec((1, c_p, n_p), lambda b, t: (b, 0, 0)),    # x
            pl.BlockSpec((2 * co_p, c_p), lambda b, t: (0, 0)),     # stacked W
            pl.BlockSpec((co_p, 1), lambda b, t: (0, 0)),           # bias
        ]
        n_idx_inputs, gather_dots = 2, 2

    # --- VMEM budget / cost hints -------------------------------------------
    vmem_bytes = (
        2 * c_p * n_p * 2                    # x block (bf16, double-buffered)
        + n_idx_inputs * 2 * K * tn * 4      # index blocks
        + 2 * co_p * tn * 4                  # output block
        + 2 * (2 * co_p) * c_p * 2           # stacked bf16 weights
        + 2 * co_p * 128 * 4                 # bias (lane padded)
        + (2 * co_p) * n_p * 2               # uv scratch (bf16)
        + gather_dots * n_p * tn * 2         # one-hot temporaries
        + 3 * co_p * tn * 4                  # acc / pre temporaries
    )
    try:
        vmem_cap = int(pltpu.get_tpu_info().vmem_capacity_bytes)
    except Exception:
        vmem_cap = 64 * 1024 * 1024          # conservative (v7x per-TC)
    vmem_limit = int(min(max(2 * vmem_bytes, 32 * 1024 * 1024),
                         int(0.75 * vmem_cap)))
    vmem_limit = max(vmem_limit, int(1.25 * vmem_bytes))

    flops = (B * 2 * (2 * co_p) * c_p * n_p                    # node transform
             + B * K * gather_dots * 2 * co_p * n_p * n_p)     # one-hot gathers
    bytes_accessed = (xs.size * 2 + n_idx_inputs * idx_j.size * 4
                      + B * co_p * n_p * 4 + w_stack.size * 2 + b_col.size * 4)

    out = pl.pallas_call(
        kernel,
        out_shape=jax.ShapeDtypeStruct((B, co_p, n_p), jnp.float32),
        grid_spec=pltpu.PrefetchScalarGridSpec(
            num_scalar_prefetch=0,
            grid=(B, n_tiles),
            in_specs=in_specs,
            out_specs=pl.BlockSpec((1, co_p, tn), lambda b, t: (b, 0, t)),
            scratch_shapes=[
                pltpu.VMEM((2 * co_p, n_p), jnp.bfloat16),   # [ut ; vt] cache
            ],
        ),
        compiler_params=pltpu.CompilerParams(
            dimension_semantics=("parallel", "arbitrary"),
            vmem_limit_bytes=vmem_limit,
        ),
        cost_estimate=pl.CostEstimate(
            flops=flops, transcendentals=0, bytes_accessed=bytes_accessed),
    )(*inputs)

    # Strip channel/node padding and restore the (B, Cout, N, 1) NCHW output.
    return out[:, :Cout, :N][..., None]


# --------------------------------------------------------------------------- #
# Pure-JAX reference & self-test
# --------------------------------------------------------------------------- #
def _reference_edge_conv(x, edge_index, weight, bias):
    """Pure-JAX f32 reference of EdgeConv2d.forward (un-factored)."""
    B, C, N, _ = x.shape
    Cout = weight.shape[0]
    xs = x[..., 0]                                               # (B, C, N)
    gather = jax.vmap(lambda xb, ib: xb[:, ib])                  # (C,N),(N,K)->(C,N,K)
    x_j = gather(xs, edge_index[0])
    x_i = gather(xs, edge_index[1])
    feat = jnp.concatenate([x_i, x_j - x_i], axis=1)             # (B, 2C, N, K)
    w2d = weight.reshape(Cout, 2 * C)
    pre = jnp.einsum('oc,bcnk->bonk', w2d, feat,
                     precision='highest') + bias[None, :, None, None]
    act = jnp.maximum(pre, 0.0)
    return jnp.max(act, axis=-1, keepdims=True)                  # (B, Cout, N, 1)


if __name__ == "__main__":
    key = jax.random.PRNGKey(0)
    kx, kw, kb, ke = jax.random.split(key, 4)

    B, C, N, K = 2, 16, 16, 8
    Cout = 32

    x = jax.random.normal(kx, (B, C, N, 1), jnp.float32)
    # knn-style edge_index: [0] = neighbor indices, [1] = center indices
    nbr_idx = jax.random.randint(ke, (B, N, K), 0, N, dtype=jnp.int32)
    center_idx = jnp.broadcast_to(
        jnp.arange(N, dtype=jnp.int32)[None, :, None], (B, N, K))
    edge_index = jnp.stack([nbr_idx, center_idx], axis=0)

    weight = jax.random.normal(kw, (Cout, 2 * C, 1, 1), jnp.float32) * 0.1
    bias = jax.random.normal(kb, (Cout,), jnp.float32) * 0.05

    ref = _reference_edge_conv(x, edge_index, weight, bias)

    # Default (auto-detected identity-center) fast path.
    out = graph_conv2d_edge_forward(x, edge_index, weight, bias)
    out = jax.block_until_ready(out)
    assert out.shape == (B, Cout, N, 1)
    max_err = float(jnp.max(jnp.abs(out - ref)))
    assert max_err < 3e-2, f"identity-path mismatch vs reference: {max_err}"

    # General (arbitrary center index) path, forced for coverage.
    out_g = graph_conv2d_edge_forward(x, edge_index, weight, bias,
                                      center_is_identity=False)
    out_g = jax.block_until_ready(out_g)
    max_err_g = float(jnp.max(jnp.abs(out_g - ref)))
    assert max_err_g < 3e-2, f"general-path mismatch vs reference: {max_err_g}"

    print("KERNEL_OK")
</pallas_src>

<mosaic_0001>
module attributes {stable_mosaic.version = 11 : i64} {
  func.func @_edge_kernel_identity(%arg0: i32, %arg1: i32, %arg2: memref<1x8x128xi32, #tpu.memory_space<vmem>>, %arg3: memref<1x16x128xbf16, #tpu.memory_space<vmem>>, %arg4: memref<64x16xbf16, #tpu.memory_space<vmem>>, %arg5: memref<32x1xf32, #tpu.memory_space<vmem>>, %arg6: memref<1x32x128xf32, #tpu.memory_space<vmem>>, %arg7: memref<64x128xbf16, #tpu.memory_space<vmem>>) attributes {dimension_semantics = [#tpu.dimension_semantics<parallel>, #tpu.dimension_semantics<arbitrary>], iteration_bounds = array<i64: 2, 1>, scalar_prefetch = 0 : i64, scratch_operands = 1 : i64, tpu.core_type = #tpu.core_type<tc>, window_params = [{transform_indices = @transform_0, window_bounds = array<i64: 1, 8, 128>}, {transform_indices = @transform_1, window_bounds = array<i64: 1, 16, 128>}, {pipeline_mode = #tpu.pipeline_mode<synchronous>, transform_indices = @transform_2, window_bounds = array<i64: 64, 16>}, {pipeline_mode = #tpu.pipeline_mode<synchronous>, transform_indices = @transform_3, window_bounds = array<i64: 32, 1>}, {transform_indices = @transform_4, window_bounds = array<i64: 1, 32, 128>}]} {
    %c0_i32 = arith.constant 0 : i32
    %0 = arith.cmpi eq, %arg1, %c0_i32 : i32
    %1 = arith.extui %0 : i1 to i32
    %c0_i32_0 = arith.constant 0 : i32
    %2 = arith.cmpi ne, %1, %c0_i32_0 : i32
    scf.if %2 {
      %c0_33 = arith.constant 0 : index
      %c0_34 = arith.constant 0 : index
      %100 = vector.load %arg4[%c0_33, %c0_34] : memref<64x16xbf16, #tpu.memory_space<vmem>>, vector<64x16xbf16>
      %c0_35 = arith.constant 0 : index
      %c0_36 = arith.constant 0 : index
      %c0_37 = arith.constant 0 : index
      %101 = vector.load %arg3[%c0_35, %c0_36, %c0_37] : memref<1x16x128xbf16, #tpu.memory_space<vmem>>, vector<1x16x128xbf16>
      %102 = vector.shape_cast %101 : vector<1x16x128xbf16> to vector<16x128xbf16>
      %cst_38 = arith.constant dense<0.000000e+00> : vector<64x128xf32>
      %103 = tpu.matmul %100, %102, %cst_38 {dimension_numbers = #tpu.dot_dimension_numbers<[1], [0], [0], [1], [0, 0, 1, 1], [], []>} : vector<64x16xbf16>, vector<16x128xbf16>, vector<64x128xf32> -> vector<64x128xf32>
      %104 = arith.truncf %103 : vector<64x128xf32> to vector<64x128xbf16>
      %c0_39 = arith.constant 0 : index
      %c0_40 = arith.constant 0 : index
      %105 = vector.load %arg7[%c0_39, %c0_40] : memref<64x128xbf16, #tpu.memory_space<vmem>>, vector<64x128xbf16>
      tpu.vector_store %arg7[%c0_39, %c0_40], %104 {strides = array<i32>} : memref<64x128xbf16, #tpu.memory_space<vmem>>, vector<64x128xbf16>,
    } else {
    }
    %c32 = arith.constant 32 : index
    %c0 = arith.constant 0 : index
    %3 = vector.load %arg7[%c32, %c0] : memref<64x128xbf16, #tpu.memory_space<vmem>>, vector<32x128xbf16>
    %4 = tpu.iota {dimensions = array<i32: 0>} : vector<128x128xi32>
    %cst = arith.constant 0xFF800000 : f32
    %5 = vector.broadcast %cst : f32 to vector<32x128xf32>
    %c0_i32_1 = arith.constant 0 : i32
    %c0_2 = arith.constant 0 : index
    %6 = arith.index_cast %c0_i32_1 : i32 to index
    %c0_3 = arith.constant 0 : index
    %7 = vector.load %arg2[%c0_2, %6, %c0_3] : memref<1x8x128xi32, #tpu.memory_space<vmem>>, vector<1x1x128xi32>
    %8 = vector.shape_cast %7 : vector<1x1x128xi32> to vector<1x128xi32>
    %9 = vector.broadcast %8 : vector<1x128xi32> to vector<128x128xi32>
    %10 = arith.cmpi eq, %4, %9 : vector<128x128xi32>
    %11 = arith.extui %10 : vector<128x128xi1> to vector<128x128xi32>
    %12 = arith.sitofp %11 : vector<128x128xi32> to vector<128x128xf32>
    %13 = arith.truncf %12 : vector<128x128xf32> to vector<128x128xbf16>
    %cst_4 = arith.constant dense<0.000000e+00> : vector<32x128xf32>
    %14 = tpu.matmul %3, %13, %cst_4 {dimension_numbers = #tpu.dot_dimension_numbers<[1], [0], [0], [1], [0, 0, 1, 1], [], []>} : vector<32x128xbf16>, vector<128x128xbf16>, vector<32x128xf32> -> vector<32x128xf32>
    %15 = arith.maximumf %5, %14 : vector<32x128xf32>
    %c1_i32 = arith.constant 1 : i32
    %c0_5 = arith.constant 0 : index
    %16 = arith.index_cast %c1_i32 : i32 to index
    %c0_6 = arith.constant 0 : index
    %17 = vector.load %arg2[%c0_5, %16, %c0_6] : memref<1x8x128xi32, #tpu.memory_space<vmem>>, vector<1x1x128xi32>
    %18 = vector.shape_cast %17 : vector<1x1x128xi32> to vector<1x128xi32>
    %19 = vector.broadcast %18 : vector<1x128xi32> to vector<128x128xi32>
    %20 = arith.cmpi eq, %4, %19 : vector<128x128xi32>
    %21 = arith.extui %20 : vector<128x128xi1> to vector<128x128xi32>
    %22 = arith.sitofp %21 : vector<128x128xi32> to vector<128x128xf32>
    %23 = arith.truncf %22 : vector<128x128xf32> to vector<128x128xbf16>
    %cst_7 = arith.constant dense<0.000000e+00> : vector<32x128xf32>
    %24 = tpu.matmul %3, %23, %cst_7 {dimension_numbers = #tpu.dot_dimension_numbers<[1], [0], [0], [1], [0, 0, 1, 1], [], []>} : vector<32x128xbf16>, vector<128x128xbf16>, vector<32x128xf32> -> vector<32x128xf32>
    %25 = arith.maximumf %15, %24 : vector<32x128xf32>
    %c2_i32 = arith.constant 2 : i32
    %c0_8 = arith.constant 0 : index
    %26 = arith.index_cast %c2_i32 : i32 to index
    %c0_9 = arith.constant 0 : index
    %27 = vector.load %arg2[%c0_8, %26, %c0_9] : memref<1x8x128xi32, #tpu.memory_space<vmem>>, vector<1x1x128xi32>
    %28 = vector.shape_cast %27 : vector<1x1x128xi32> to vector<1x128xi32>
    %29 = vector.broadcast %28 : vector<1x128xi32> to vector<128x128xi32>
    %30 = arith.cmpi eq, %4, %29 : vector<128x128xi32>
    %31 = arith.extui %30 : vector<128x128xi1> to vector<128x128xi32>
    %32 = arith.sitofp %31 : vector<128x128xi32> to vector<128x128xf32>
    %33 = arith.truncf %32 : vector<128x128xf32> to vector<128x128xbf16>
    %cst_10 = arith.constant dense<0.000000e+00> : vector<32x128xf32>
    %34 = tpu.matmul %3, %33, %cst_10 {dimension_numbers = #tpu.dot_dimension_numbers<[1], [0], [0], [1], [0, 0, 1, 1], [], []>} : vector<32x128xbf16>, vector<128x128xbf16>, vector<32x128xf32> -> vector<32x128xf32>
    %35 = arith.maximumf %25, %34 : vector<32x128xf32>
    %c3_i32 = arith.constant 3 : i32
    %c0_11 = arith.constant 0 : index
    %36 = arith.index_cast %c3_i32 : i32 to index
    %c0_12 = arith.constant 0 : index
    %37 = vector.load %arg2[%c0_11, %36, %c0_12] : memref<1x8x128xi32, #tpu.memory_space<vmem>>, vector<1x1x128xi32>
    %38 = vector.shape_cast %37 : vector<1x1x128xi32> to vector<1x128xi32>
    %39 = vector.broadcast %38 : vector<1x128xi32> to vector<128x128xi32>
    %40 = arith.cmpi eq, %4, %39 : vector<128x128xi32>
    %41 = arith.extui %40 : vector<128x128xi1> to vector<128x128xi32>
    %42 = arith.sitofp %41 : vector<128x128xi32> to vector<128x128xf32>
    %43 = arith.truncf %42 : vector<128x128xf32> to vector<128x128xbf16>
    %cst_13 = arith.constant dense<0.000000e+00> : vector<32x128xf32>
    %44 = tpu.matmul %3, %43, %cst_13 {dimension_numbers = #tpu.dot_dimension_numbers<[1], [0], [0], [1], [0, 0, 1, 1], [], []>} : vector<32x128xbf16>, vector<128x128xbf16>, vector<32x128xf32> -> vector<32x128xf32>
    %45 = arith.maximumf %35, %44 : vector<32x128xf32>
    %c4_i32 = arith.constant 4 : i32
    %c0_14 = arith.constant 0 : index
    %46 = arith.index_cast %c4_i32 : i32 to index
    %c0_15 = arith.constant 0 : index
    %47 = vector.load %arg2[%c0_14, %46, %c0_15] : memref<1x8x128xi32, #tpu.memory_space<vmem>>, vector<1x1x128xi32>
    %48 = vector.shape_cast %47 : vector<1x1x128xi32> to vector<1x128xi32>
    %49 = vector.broadcast %48 : vector<1x128xi32> to vector<128x128xi32>
    %50 = arith.cmpi eq, %4, %49 : vector<128x128xi32>
    %51 = arith.extui %50 : vector<128x128xi1> to vector<128x128xi32>
    %52 = arith.sitofp %51 : vector<128x128xi32> to vector<128x128xf32>
    %53 = arith.truncf %52 : vector<128x128xf32> to vector<128x128xbf16>
    %cst_16 = arith.constant dense<0.000000e+00> : vector<32x128xf32>
    %54 = tpu.matmul %3, %53, %cst_16 {dimension_numbers = #tpu.dot_dimension_numbers<[1], [0], [0], [1], [0, 0, 1, 1], [], []>} : vector<32x128xbf16>, vector<128x128xbf16>, vector<32x128xf32> -> vector<32x128xf32>
    %55 = arith.maximumf %45, %54 : vector<32x128xf32>
    %c5_i32 = arith.constant 5 : i32
    %c0_17 = arith.constant 0 : index
    %56 = arith.index_cast %c5_i32 : i32 to index
    %c0_18 = arith.constant 0 : index
    %57 = vector.load %arg2[%c0_17, %56, %c0_18] : memref<1x8x128xi32, #tpu.memory_space<vmem>>, vector<1x1x128xi32>
    %58 = vector.shape_cast %57 : vector<1x1x128xi32> to vector<1x128xi32>
    %59 = vector.broadcast %58 : vector<1x128xi32> to vector<128x128xi32>
    %60 = arith.cmpi eq, %4, %59 : vector<128x128xi32>
    %61 = arith.extui %60 : vector<128x128xi1> to vector<128x128xi32>
    %62 = arith.sitofp %61 : vector<128x128xi32> to vector<128x128xf32>
    %63 = arith.truncf %62 : vector<128x128xf32> to vector<128x128xbf16>
    %cst_19 = arith.constant dense<0.000000e+00> : vector<32x128xf32>
    %64 = tpu.matmul %3, %63, %cst_19 {dimension_numbers = #tpu.dot_dimension_numbers<[1], [0], [0], [1], [0, 0, 1, 1], [], []>} : vector<32x128xbf16>, vector<128x128xbf16>, vector<32x128xf32> -> vector<32x128xf32>
    %65 = arith.maximumf %55, %64 : vector<32x128xf32>
    %c6_i32 = arith.constant 6 : i32
    %c0_20 = arith.constant 0 : index
    %66 = arith.index_cast %c6_i32 : i32 to index
    %c0_21 = arith.constant 0 : index
    %67 = vector.load %arg2[%c0_20, %66, %c0_21] : memref<1x8x128xi32, #tpu.memory_space<vmem>>, vector<1x1x128xi32>
    %68 = vector.shape_cast %67 : vector<1x1x128xi32> to vector<1x128xi32>
    %69 = vector.broadcast %68 : vector<1x128xi32> to vector<128x128xi32>
    %70 = arith.cmpi eq, %4, %69 : vector<128x128xi32>
    %71 = arith.extui %70 : vector<128x128xi1> to vector<128x128xi32>
    %72 = arith.sitofp %71 : vector<128x128xi32> to vector<128x128xf32>
    %73 = arith.truncf %72 : vector<128x128xf32> to vector<128x128xbf16>
    %cst_22 = arith.constant dense<0.000000e+00> : vector<32x128xf32>
    %74 = tpu.matmul %3, %73, %cst_22 {dimension_numbers = #tpu.dot_dimension_numbers<[1], [0], [0], [1], [0, 0, 1, 1], [], []>} : vector<32x128xbf16>, vector<128x128xbf16>, vector<32x128xf32> -> vector<32x128xf32>
    %75 = arith.maximumf %65, %74 : vector<32x128xf32>
    %c7_i32 = arith.constant 7 : i32
    %c0_23 = arith.constant 0 : index
    %76 = arith.index_cast %c7_i32 : i32 to index
    %c0_24 = arith.constant 0 : index
    %77 = vector.load %arg2[%c0_23, %76, %c0_24] : memref<1x8x128xi32, #tpu.memory_space<vmem>>, vector<1x1x128xi32>
    %78 = vector.shape_cast %77 : vector<1x1x128xi32> to vector<1x128xi32>
    %79 = vector.broadcast %78 : vector<1x128xi32> to vector<128x128xi32>
    %80 = arith.cmpi eq, %4, %79 : vector<128x128xi32>
    %81 = arith.extui %80 : vector<128x128xi1> to vector<128x128xi32>
    %82 = arith.sitofp %81 : vector<128x128xi32> to vector<128x128xf32>
    %83 = arith.truncf %82 : vector<128x128xf32> to vector<128x128xbf16>
    %cst_25 = arith.constant dense<0.000000e+00> : vector<32x128xf32>
    %84 = tpu.matmul %3, %83, %cst_25 {dimension_numbers = #tpu.dot_dimension_numbers<[1], [0], [0], [1], [0, 0, 1, 1], [], []>} : vector<32x128xbf16>, vector<128x128xbf16>, vector<32x128xf32> -> vector<32x128xf32>
    %85 = arith.maximumf %75, %84 : vector<32x128xf32>
    %c8_i32 = arith.constant 8 : i32
    %c128_i32 = arith.constant 128 : i32
    %86 = arith.muli %arg1, %c128_i32 : i32
    %87 = tpu.assume_multiple %86, 128 : i32
    %c0_26 = arith.constant 0 : index
    %88 = arith.index_cast %87 : i32 to index
    %89 = vector.load %arg7[%c0_26, %88] : memref<64x128xbf16, #tpu.memory_space<vmem>>, vector<32x128xbf16>
    %90 = arith.extf %89 : vector<32x128xbf16> to vector<32x128xf32>
    %91 = arith.addf %85, %90 : vector<32x128xf32>
    %c0_27 = arith.constant 0 : index
    %c0_28 = arith.constant 0 : index
    %92 = vector.load %arg5[%c0_27, %c0_28] : memref<32x1xf32, #tpu.memory_space<vmem>>, vector<32x1xf32>
    %93 = vector.broadcast %92 : vector<32x1xf32> to vector<32x128xf32>
    %94 = arith.addf %91, %93 : vector<32x128xf32>
    %cst_29 = arith.constant 0.000000e+00 : f32
    %95 = vector.broadcast %cst_29 : f32 to vector<32x128xf32>
    %96 = arith.maximumf %94, %95 : vector<32x128xf32>
    %c0_30 = arith.constant 0 : index
    %c0_31 = arith.constant 0 : index
    %c0_32 = arith.constant 0 : index
    %97 = vector.load %arg6[%c0_30, %c0_31, %c0_32] : memref<1x32x128xf32, #tpu.memory_space<vmem>>, vector<1x32x128xf32>
    %98 = vector.shape_cast %97 : vector<1x32x128xf32> to vector<32x128xf32>
    %99 = vector.shape_cast %96 : vector<32x128xf32> to vector<1x32x128xf32>
    tpu.vector_store %arg6[%c0_30, %c0_31, %c0_32], %99 {strides = array<i32>} : memref<1x32x128xf32, #tpu.memory_space<vmem>>, vector<1x32x128xf32>,
    return
  }
  func.func @transform_0(%arg0: i32, %arg1: i32) -> (i32, i32, i32) {
    %c0_i32 = arith.constant 0 : i32
    %c0_i32_0 = arith.constant 0 : i32
    return %arg0, %c0_i32, %arg1 : i32, i32, i32
  }
  func.func @transform_1(%arg0: i32, %arg1: i32) -> (i32, i32, i32) {
    %c0_i32 = arith.constant 0 : i32
    %c0_i32_0 = arith.constant 0 : i32
    %c0_i32_1 = arith.constant 0 : i32
    return %arg0, %c0_i32, %c0_i32_0 : i32, i32, i32
  }
  func.func @transform_2(%arg0: i32, %arg1: i32) -> (i32, i32) {
    %c0_i32 = arith.constant 0 : i32
    %c0_i32_0 = arith.constant 0 : i32
    %c0_i32_1 = arith.constant 0 : i32
    return %c0_i32, %c0_i32_0 : i32, i32
  }
  func.func @transform_3(%arg0: i32, %arg1: i32) -> (i32, i32) {
    %c0_i32 = arith.constant 0 : i32
    %c0_i32_0 = arith.constant 0 : i32
    %c0_i32_1 = arith.constant 0 : i32
    return %c0_i32, %c0_i32_0 : i32, i32
  }
  func.func @transform_4(%arg0: i32, %arg1: i32) -> (i32, i32, i32) {
    %c0_i32 = arith.constant 0 : i32
    %c0_i32_0 = arith.constant 0 : i32
    return %arg0, %c0_i32, %arg1 : i32, i32, i32
  }
}

</mosaic_0001>

<llo_original>
// kernel: tpu_custom_call.1
$region0: #{tpu_custom_call.1}
  #allocation0 [shape = 'u32[]', space=smem, size = 0x4, offset = 0x4, fixed_abs, tag = 'smem constant byte address 0x4 - core index']
  #allocation1 [shape = 'u32[72,128]{1,0:T(1,128)}', space=vmem, size = 0x9000, scoped, tag = 'internal scratch']
  #allocation2 [shape = 'bf16[64,128]{1,0:T(8,128)(2,1)}', space=vmem, size = 0x4000, scoped, tag = 'scratch operand']
  %s0 = inlined_call_operand.vmem [shape: s32[2,8,128], index: 0, kind: input, shape index: {}]
  %s1 = inlined_call_operand.vmem [shape: bf16[2,16,128], index: 1, kind: input, shape index: {}]
  %s2 = inlined_call_operand.vmem [shape: bf16[64,16], index: 2, kind: input, shape index: {}]
  %s3 = inlined_call_operand.vmem [shape: f32[32,1], index: 3, kind: input, shape index: {}]
  %s4 = inlined_call_operand.hbm [shape: f32[2,32,128], index: 4, kind: output, shape index: {}]
  %s5 = sld [smem:[#allocation0]]
  $region53: #{tpu_custom_call.1} parent=0
    _
  %s7 = ssub.s32 1, %s5
  %s8 = scalar_select 0, %s7, %s5
  $region1: #{tpu_custom_call.1} parent=0
    #allocation3 [shape = 'u8[32768]{0}', space=vmem, size = 0x8000, scoped, tag = 'output window, operand 0']
    #allocation4 [shape = 's32[2]{0}', space=sflag, size = 0x8, scoped, tag = 'scoped memory for tpu_custom_call.1']
    %9 = vsyncpa [#allocation4], 0
    %s10 = scalar_lea.sflag [#allocation4], 1
    %11 = vsyncpa %s10, 0
    loop: start=0, step=1, limit=4
    $region2: #{tpu_custom_call.1} parent=1 // loop_pre_header
      _
    $region3: #{tpu_custom_call.1} parent=1 // loop_header
      %s13 = sphi 0, %s17
      %p14 = scmp.ge.s32.totalorder %s13, 4
      %s20 = sphi 0, %s32
      %s21 = sphi 0, %s28
      %s22 = sphi 0, %s20
      %s23 = sphi 0, %s21
      %s24 = sphi 0, %s22
      %s25 = sphi 0, %s23
      %s37 = sphi 0, %s39
      %s40 = sphi 0, %s37
      %s41 = sphi 0, %s40
      %s57 = sphi 0, %s41
      %s63 = sphi 0, %s65
      %s66 = sphi 0, %s63
      %s67 = sphi 0, %s66
      %s83 = sphi 0, %s67
      %s87 = sphi 0, %s87
      %s89 = sphi 0, %s87
      %s90 = sphi 0, %s89
      %s104 = sphi 0, %s90
      %s108 = sphi 0, %s108
      %s110 = sphi 0, %s108
      %s111 = sphi 0, %s110
      %s125 = sphi 0, %s111
      %s133 = sphi 0, %s135
      %s136 = sphi 0, %s133
      %s137 = sphi 0, %s136
      %s153 = sphi 0, %s137
    $region4: #{tpu_custom_call.1} parent=1 // loop_header_branch
      %16 = sbr.rel (%p14) target = $region8
    $region5: #{tpu_custom_call.1} parent=1 // loop_body
      %s18 = ssub.s32 %s13, 1
      %s19 = ssub.s32 %s13, 2
      %s26 = sadd.s32 1, %s21
      %p27 = scmp.ge.s32.totalorder %s26, 1
      %s28 = scalar_select %p27, 0, %s26
      %s29 = sadd.s32 1, %s20
      %s30 = scalar_select %p27, %s29, %s20
      %p31 = scmp.ge.s32.totalorder %s30, 2
      %s32 = scalar_select %p31, 0, %s30
      %s33 = ssub.s32 %s20, %s32
      %s34 = ssub.s32 %s21, %s28
      %s35 = sor.u32 %s33, %s34
      %p36 = scmp.eq.s32.totalorder %s35, 0
      %s38 = sadd.s32 %s37, 1
      %s39 = scalar_select %p36, %s37, %s38
      %p42 = pneg %p36
      %p43 = scmp.eq.s32.totalorder %s13, 1
      %p44 = por %p42, %p43
      %p45 = scmp.ne.s32.totalorder %s37, %s40
      %p46 = scmp.eq.s32.totalorder %s13, 0
      %p47 = por %p45, %p46
      %p48 = scmp.ne.s32.totalorder %s37, %s40
      %p49 = scmp.eq.s32.totalorder %s18, 1
      %p50 = por %p48, %p49
      %p51 = scmp.ne.s32.totalorder %s40, %s41
      %p52 = scmp.eq.s32.totalorder %s18, 0
      %p53 = por %p51, %p52
      %p54 = scmp.ne.s32.totalorder %s40, %s41
      %p55 = scmp.eq.s32.totalorder %s19, 1
      %p56 = por %p54, %p55
      %p58 = scmp.ne.s32.totalorder %s41, %s57
      %p59 = scmp.eq.s32.totalorder %s19, 0
      %p60 = por %p58, %p59
      %s61 = ssub.s32 %s20, %s32
      %p62 = scmp.eq.s32.totalorder %s61, 0
      %s64 = sadd.s32 %s63, 1
      %s65 = scalar_select %p62, %s63, %s64
      %p68 = pneg %p62
      %p69 = scmp.eq.s32.totalorder %s13, 1
      %p70 = por %p68, %p69
      %p71 = scmp.ne.s32.totalorder %s63, %s66
      %p72 = scmp.eq.s32.totalorder %s13, 0
      %p73 = por %p71, %p72
      %p74 = scmp.ne.s32.totalorder %s63, %s66
      %p75 = scmp.eq.s32.totalorder %s18, 1
      %p76 = por %p74, %p75
      %p77 = scmp.ne.s32.totalorder %s66, %s67
      %p78 = scmp.eq.s32.totalorder %s18, 0
      %p79 = por %p77, %p78
      %p80 = scmp.ne.s32.totalorder %s66, %s67
      %p81 = scmp.eq.s32.totalorder %s19, 1
      %p82 = por %p80, %p81
      %p84 = scmp.ne.s32.totalorder %s67, %s83
      %p85 = scmp.eq.s32.totalorder %s19, 0
      %p86 = por %p84, %p85
      %s88 = sadd.s32 %s87, 1
      %p91 = scmp.eq.s32.totalorder %s13, 1
      %p92 = scmp.ne.s32.totalorder %s87, %s89
      %p93 = scmp.eq.s32.totalorder %s13, 0
      %p94 = por %p92, %p93
      %p95 = scmp.ne.s32.totalorder %s87, %s89
      %p96 = scmp.eq.s32.totalorder %s18, 1
      %p97 = por %p95, %p96
      %p98 = scmp.ne.s32.totalorder %s89, %s90
      %p99 = scmp.eq.s32.totalorder %s18, 0
      %p100 = por %p98, %p99
      %p101 = scmp.ne.s32.totalorder %s89, %s90
      %p102 = scmp.eq.s32.totalorder %s19, 1
      %p103 = por %p101, %p102
      %p105 = scmp.ne.s32.totalorder %s90, %s104
      %p106 = scmp.eq.s32.totalorder %s19, 0
      %p107 = por %p105, %p106
      %s109 = sadd.s32 %s108, 1
      %p112 = scmp.eq.s32.totalorder %s13, 1
      %p113 = scmp.ne.s32.totalorder %s108, %s110
      %p114 = scmp.eq.s32.totalorder %s13, 0
      %p115 = por %p113, %p114
      %p116 = scmp.ne.s32.totalorder %s108, %s110
      %p117 = scmp.eq.s32.totalorder %s18, 1
      %p118 = por %p116, %p117
      %p119 = scmp.ne.s32.totalorder %s110, %s111
      %p120 = scmp.eq.s32.totalorder %s18, 0
      %p121 = por %p119, %p120
      %p122 = scmp.ne.s32.totalorder %s110, %s111
      %p123 = scmp.eq.s32.totalorder %s19, 1
      %p124 = por %p122, %p123
      %p126 = scmp.ne.s32.totalorder %s111, %s125
      %p127 = scmp.eq.s32.totalorder %s19, 0
      %p128 = por %p126, %p127
      %s129 = ssub.s32 %s20, %s32
      %s130 = ssub.s32 %s21, %s28
      %s131 = sor.u32 %s129, %s130
      %p132 = scmp.eq.s32.totalorder %s131, 0
      %s134 = sadd.s32 %s133, 1
      %s135 = scalar_select %p132, %s133, %s134
      %p138 = pneg %p132
      %p139 = scmp.eq.s32.totalorder %s13, 1
      %p140 = por %p138, %p139
      %p141 = scmp.ne.s32.totalorder %s133, %s136
      %p142 = scmp.eq.s32.totalorder %s13, 0
      %p143 = por %p141, %p142
      %p144 = scmp.ne.s32.totalorder %s133, %s136
      %p145 = scmp.eq.s32.totalorder %s18, 1
      %p146 = por %p144, %p145
      %p147 = scmp.ne.s32.totalorder %s136, %s137
      %p148 = scmp.eq.s32.totalorder %s18, 0
      %p149 = por %p147, %p148
      %p150 = scmp.ne.s32.totalorder %s136, %s137
      %p151 = scmp.eq.s32.totalorder %s19, 1
      %p152 = por %p150, %p151
      %p154 = scmp.ne.s32.totalorder %s137, %s153
      %p155 = scmp.eq.s32.totalorder %s19, 0
      %p156 = por %p154, %p155
      %p157 = scmp.le.s32.totalorder 1, %s13
      %p158 = scmp.lt.s32.totalorder %s13, 3
      %p159 = pnand %p157, %p158
      %p160 = pneg %p159
      // Predicated region
      $region9: #{tpu_custom_call.1} parent=5 // pred_check
        _
      $region10: #{tpu_custom_call.1} parent=5 // pred_check_branch
        %162 = sbr.rel (%p159) target = $region12
      $region11: #{tpu_custom_call.1} parent=5 // pred_region
        %s163 = ssub.s32 %s13, 1
        // Predicated region
        $region13: #{tpu_custom_call.1} parent=11 // pred_check
          %p164 = pneg %p100
        $region14: #{tpu_custom_call.1} parent=11 // pred_check_branch
          %166 = sbr.rel (%p164) target = $region16
        $region15: #{tpu_custom_call.1} parent=11 // pred_region
          _
        $region16: #{tpu_custom_call.1} parent=11 // pred_fallthru
          _
        // Predicated region
        $region17: #{tpu_custom_call.1} parent=11 // pred_check
          %p167 = pneg %p121
        $region18: #{tpu_custom_call.1} parent=11 // pred_check_branch
          %169 = sbr.rel (%p167) target = $region20
        $region19: #{tpu_custom_call.1} parent=11 // pred_region
          _
        $region20: #{tpu_custom_call.1} parent=11 // pred_fallthru
          _
      $region12: #{tpu_custom_call.1} parent=5 // pred_fallthru
        _
      %p170 = scmp.lt.s32.totalorder %s13, 2
      // Predicated region
      $region21: #{tpu_custom_call.1} parent=5 // pred_check
        %p171 = pneg %p170
      $region22: #{tpu_custom_call.1} parent=5 // pred_check_branch
        %173 = sbr.rel (%p171) target = $region24
      $region23: #{tpu_custom_call.1} parent=5 // pred_region
        // Predicated region
        $region25: #{tpu_custom_call.1} parent=23 // pred_check
          %p174 = pneg %p47
        $region26: #{tpu_custom_call.1} parent=23 // pred_check_branch
          %176 = sbr.rel (%p174) target = $region28
        $region27: #{tpu_custom_call.1} parent=23 // pred_region
          %p177 = scmp.lt.s32.totalorder %s20, 1
          %s178 = scalar_select %p177, %s20, 1
          %p179 = scmp.lt.s32.totalorder %s21, 0
          %s180 = scalar_select %p179, %s21, 0
          %s181 = sadd.s32 %s180, %s178
          %s182 = smul.addr %s181, 8
          %s183 = scalar_lea.vmem %s0, %s182
        $region28: #{tpu_custom_call.1} parent=23 // pred_fallthru
          _
        // Predicated region
        $region29: #{tpu_custom_call.1} parent=23 // pred_check
          %p184 = pneg %p73
        $region30: #{tpu_custom_call.1} parent=23 // pred_check_branch
          %186 = sbr.rel (%p184) target = $region32
        $region31: #{tpu_custom_call.1} parent=23 // pred_region
          %p187 = scmp.lt.s32.totalorder %s20, 1
          %s188 = scalar_select %p187, %s20, 1
          %s189 = smul.addr %s188, 2
          %s190 = smul.addr %s189, 4
          %s191 = scalar_lea.vmem %s1, %s190
        $region32: #{tpu_custom_call.1} parent=23 // pred_fallthru
          _
      $region24: #{tpu_custom_call.1} parent=5 // pred_fallthru
        _
      %p192 = scmp.le.s32.totalorder 1, %s13
      %p193 = scmp.lt.s32.totalorder %s13, 3
      %p194 = pnand %p192, %p193
      %p195 = pneg %p194
      // Predicated region
      $region33: #{tpu_custom_call.1} parent=5 // pred_check
        _
      $region34: #{tpu_custom_call.1} parent=5 // pred_check_branch
        %197 = sbr.rel (%p194) target = $region36
      $region35: #{tpu_custom_call.1} parent=5 // pred_region
        %s198 = ssub.s32 %s13, 1
        %p199 = scmp.lt.s32.totalorder %s22, 1
        %s200 = scalar_select %p199, %s22, 1
        %p201 = scmp.lt.s32.totalorder %s23, 0
        %s202 = scalar_select %p201, %s23, 0
        %s203 = sadd.s32 %s202, %s200
        %s204 = smul.addr %s203, 8
        %s205 = scalar_lea.vmem %s0, %s204
        %p206 = pneg %p53
        %p207 = pneg %p50
        %p208 = scmp.lt.s32.totalorder %s22, 1
        %s209 = scalar_select %p208, %s22, 1
        %s210 = smul.addr %s209, 2
        %s211 = smul.addr %s210, 4
        %s212 = scalar_lea.vmem %s1, %s211
        %p213 = pneg %p79
        %p214 = pneg %p76
        %p215 = pneg %p100
        %p216 = pneg %p97
        %p217 = pneg %p121
        %p218 = pneg %p118
        %p219 = pneg %p149
        %p220 = pneg %p146
        %s221 = sand.u32 %s136, 1
        %s222 = scalar_lea.sflag [#allocation4], %s221
        %s223 = sand.u32 %s136, 1
        %s224 = smul.addr %s223, 32
        %s225 = scalar_lea.vmem [#allocation3], %s224
        %p226 = scmp.lt.s32.totalorder %s22, 1
        %s227 = scalar_select %p226, %s22, 1
        %p228 = scmp.lt.s32.totalorder %s23, 0
        %s229 = scalar_select %p228, %s23, 0
        %s230 = sadd.s32 %s229, %s227
        %s231 = smul.addr %s230, 8
        %s232 = scalar_lea.vmem %s0, %s231
        %p233 = scmp.lt.s32.totalorder %s22, 1
        %s234 = scalar_select %p233, %s22, 1
        %s235 = smul.addr %s234, 2
        %s236 = smul.addr %s235, 4
        %s237 = scalar_lea.vmem %s1, %s236
        %p239 = scmp.eq.s32.totalorder %s23, 0
        // Predicated region
        $region37: #{tpu_custom_call.1} parent=35 // pred_check
          %p240 = pneg %p239
        $region38: #{tpu_custom_call.1} parent=35 // pred_check_branch
          %242 = sbr.rel (%p240) target = $region40
        $region39: #{tpu_custom_call.1} parent=35 // pred_region
          %v243 = vld [vmem:[%s2] sm:$0xf]
          %v244 = vld [vmem:[%s2 + $0x4] sm:$0xf]
          %v245 = vld [vmem:[%s2 + $0x8] sm:$0xf]
          %v246 = vld [vmem:[%s2 + $0xc] sm:$0xf]
          %v247 = vld [vmem:[%s2 + $0x10] sm:$0xf]
          %v248 = vld [vmem:[%s2 + $0x14] sm:$0xf]
          %v249 = vld [vmem:[%s2 + $0x18] sm:$0xf]
          %v250 = vld [vmem:[%s2 + $0x1c] sm:$0xf]
          %v251 = vld [vmem:[%s237] sm:$0xf]
          %v252 = vld [vmem:[%s237 + $0x4] sm:$0xf]
          %v261 = vunpack.c.l.b16 %v243
          %v262 = vunpack.c.l.b16 %v244
          %v263 = vunpack.c.l.b16 %v245
          %v264 = vunpack.c.l.b16 %v246
          %v265 = vunpack.c.l.b16 %v247
          %v266 = vunpack.c.l.b16 %v248
          %v267 = vunpack.c.l.b16 %v249
          %v268 = vunpack.c.l.b16 %v250
          %v269 = vpack.c.b16 %v262, %v261
          %v270 = vpack.c.b16 %v264, %v263
          %v271 = vpack.c.b16 %v266, %v265
          %v272 = vpack.c.b16 %v268, %v267
          %v275 = vunpack.c.l.b16 %v251
          %v276 = vunpack.c.l.b16 %v252
          %v277 = vpack.c.b16 %v276, %v275
          %vm279 = vcmask 130048
          %v281 = vsel %vm279, %v269, 0
          %v284 = vsel %vm279, %v270, 0
          %v287 = vsel %vm279, %v271, 0
          %v290 = vsel %vm279, %v272, 0
          %292 = vmatpush.bf16.msra.mxu0 0
          %293 = vmatpush.bf16.msra.mxu0 0
          %294 = vmatpush.bf16.msra.mxu0 0
          %295 = vmatpush.bf16.msra.mxu0 0
          %296 = vmatpush.bf16.msra.mxu0 0
          %297 = vmatpush.bf16.msra.mxu0 0
          %298 = vmatpush.bf16.msra.mxu0 0
          %299 = vmatpush.bf16.msra.mxu0 %v277
          %300 = vmatmul.bf16.gmra.mxu0 %v281
          %v301 = vpop.f32.mrf.mxu0
          %v302 = vadd.f32 0.0, %v301
          %v303 = vpop.f32.mrf.mxu0
          %v304 = vadd.f32 0.0, %v303
          %305 = vmatmul.bf16.gmra.mxu0 %v284
          %v306 = vpop.f32.mrf.mxu0
          %v307 = vadd.f32 0.0, %v306
          %v308 = vpop.f32.mrf.mxu0
          %v309 = vadd.f32 0.0, %v308
          %310 = vmatmul.bf16.gmra.mxu0 %v287
          %v311 = vpop.f32.mrf.mxu0
          %v312 = vadd.f32 0.0, %v311
          %v313 = vpop.f32.mrf.mxu0
          %v314 = vadd.f32 0.0, %v313
          %315 = vmatmul.bf16.gmra.mxu0 %v290
          %v316 = vpop.f32.mrf.mxu0
          %v317 = vadd.f32 0.0, %v316
          %v318 = vpop.f32.mrf.mxu0
          %v319 = vadd.f32 0.0, %v318
          %320 = vdwg.mxu0
          %v321 = vpack.c.bf16 %v302, %v302
          %v322 = vpack.c.bf16 %v304, %v304
          %v323 = vpack.c.bf16 %v307, %v307
          %v324 = vpack.c.bf16 %v309, %v309
          %v325 = vpack.c.bf16 %v312, %v312
          %v326 = vpack.c.bf16 %v314, %v314
          %v327 = vpack.c.bf16 %v317, %v317
          %v328 = vpack.c.bf16 %v319, %v319
          %329 = vst [vmem:[#allocation2] sm:$0xf] %v321
          %330 = vst [vmem:[#allocation2 + $0x4] sm:$0xf] %v322
          %331 = vst [vmem:[#allocation2 + $0x8] sm:$0xf] %v323
          %332 = vst [vmem:[#allocation2 + $0xc] sm:$0xf] %v324
          %333 = vst [vmem:[#allocation2 + $0x10] sm:$0xf] %v325
          %334 = vst [vmem:[#allocation2 + $0x14] sm:$0xf] %v326
          %335 = vst [vmem:[#allocation2 + $0x18] sm:$0xf] %v327
          %336 = vst [vmem:[#allocation2 + $0x1c] sm:$0xf] %v328
        $region40: #{tpu_custom_call.1} parent=35 // pred_fallthru
          _
        %v337 = vld [vmem:[#allocation2 + $0x10] sm:$0xf]
        %v338 = vld [vmem:[#allocation2 + $0x14] sm:$0xf]
        %v339 = vld [vmem:[#allocation2 + $0x18] sm:$0xf]
        %v340 = vld [vmem:[#allocation2 + $0x1c] sm:$0xf]
        %v341 = vlaneseq
        %v342 = vshrl.u32 %v341, 7
        %v343 = vadd.s32 %v342, 8
        %v344 = vadd.s32 %v342, 16
        %v345 = vadd.s32 %v342, 24
        %v346 = vadd.s32 %v342, 32
        %v347 = vadd.s32 %v342, 40
        %v348 = vadd.s32 %v342, 48
        %v349 = vadd.s32 %v342, 56
        %v350 = vadd.s32 %v342, 64
        %v351 = vadd.s32 %v342, 72
        %v352 = vadd.s32 %v342, 80
        %v353 = vadd.s32 %v342, 88
        %v354 = vadd.s32 %v342, 96
        %v355 = vadd.s32 %v342, 104
        %v356 = vadd.s32 %v342, 112
        %v357 = vadd.s32 %v342, 120
        %v358 = vld [vmem:[%s232] sm:$0x1]
        %v359 = vperm.slane %v358, 0
        %vm360 = vcmp.eq.s32.totalorder %v342, %v359
        %vm361 = vcmp.eq.s32.totalorder %v343, %v359
        %vm362 = vcmp.eq.s32.totalorder %v344, %v359
        %vm363 = vcmp.eq.s32.totalorder %v345, %v359
        %vm364 = vcmp.eq.s32.totalorder %v346, %v359
        %vm365 = vcmp.eq.s32.totalorder %v347, %v359
        %vm366 = vcmp.eq.s32.totalorder %v348, %v359
        %vm367 = vcmp.eq.s32.totalorder %v349, %v359
        %vm368 = vcmp.eq.s32.totalorder %v350, %v359
        %vm369 = vcmp.eq.s32.totalorder %v351, %v359
        %vm370 = vcmp.eq.s32.totalorder %v352, %v359
        %vm371 = vcmp.eq.s32.totalorder %v353, %v359
        %vm372 = vcmp.eq.s32.totalorder %v354, %v359
        %vm373 = vcmp.eq.s32.totalorder %v355, %v359
        %vm374 = vcmp.eq.s32.totalorder %v356, %v359
        %vm375 = vcmp.eq.s32.totalorder %v357, %v359
        %v376 = vsel %vm360, 1, 0
        %v377 = vsel %vm361, 1, 0
        %v378 = vsel %vm362, 1, 0
        %v379 = vsel %vm363, 1, 0
        %v380 = vsel %vm364, 1, 0
        %v381 = vsel %vm365, 1, 0
        %v382 = vsel %vm366, 1, 0
        %v383 = vsel %vm367, 1, 0
        %v384 = vsel %vm368, 1, 0
        %v385 = vsel %vm369, 1, 0
        %v386 = vsel %vm370, 1, 0
        %v387 = vsel %vm371, 1, 0
        %v388 = vsel %vm372, 1, 0
        %v389 = vsel %vm373, 1, 0
        %v390 = vsel %vm374, 1, 0
        %v391 = vsel %vm375, 1, 0
        %v392 = vcvt.s32.f32 %v376
        %v393 = vcvt.s32.f32 %v377
        %v394 = vcvt.s32.f32 %v378
        %v395 = vcvt.s32.f32 %v379
        %v396 = vcvt.s32.f32 %v380
        %v397 = vcvt.s32.f32 %v381
        %v398 = vcvt.s32.f32 %v382
        %v399 = vcvt.s32.f32 %v383
        %v400 = vcvt.s32.f32 %v384
        %v401 = vcvt.s32.f32 %v385
        %v402 = vcvt.s32.f32 %v386
        %v403 = vcvt.s32.f32 %v387
        %v404 = vcvt.s32.f32 %v388
        %v405 = vcvt.s32.f32 %v389
        %v406 = vcvt.s32.f32 %v390
        %v407 = vcvt.s32.f32 %v391
        %v408 = vpack.c.bf16 %v393, %v392
        %v409 = vpack.c.bf16 %v395, %v394
        %v410 = vpack.c.bf16 %v397, %v396
        %v411 = vpack.c.bf16 %v399, %v398
        %v412 = vpack.c.bf16 %v401, %v400
        %v413 = vpack.c.bf16 %v403, %v402
        %v414 = vpack.c.bf16 %v405, %v404
        %v415 = vpack.c.bf16 %v407, %v406
        %v420 = vunpack.c.l.b16 %v337
        %v421 = vunpack.c.l.b16 %v338
        %v422 = vunpack.c.l.b16 %v339
        %v423 = vunpack.c.l.b16 %v340
        %v424 = vpack.c.b16 %v421, %v420
        %v425 = vpack.c.b16 %v423, %v422
        %428 = vmatpush.bf16.msra.mxu0 %v415
        %429 = vmatpush.bf16.msra.mxu0 %v414
        %430 = vmatpush.bf16.msra.mxu0 %v413
        %431 = vmatpush.bf16.msra.mxu0 %v412
        %432 = vmatpush.bf16.msra.mxu0 %v411
        %433 = vmatpush.bf16.msra.mxu0 %v410
        %434 = vmatpush.bf16.msra.mxu0 %v409
        %435 = vmatpush.bf16.msra.mxu0 %v408
        %436 = vmatmul.bf16.gmra.mxu0 %v424
        %v437 = vpop.f32.mrf.mxu0
        %v438 = vadd.f32 0.0, %v437
        %v439 = vpop.f32.mrf.mxu0
        %v440 = vadd.f32 0.0, %v439
        %441 = vmatmul.bf16.gmra.mxu0 %v425
        %v442 = vpop.f32.mrf.mxu0
        %v443 = vadd.f32 0.0, %v442
        %v444 = vpop.f32.mrf.mxu0
        %v445 = vadd.f32 0.0, %v444
        %446 = vdwg.mxu0
        %v447 = vld [vmem:[%s232 + $0x1] sm:$0x1]
        %v448 = vperm.slane %v447, 0
        %vm449 = vcmp.eq.s32.totalorder %v342, %v448
        %vm450 = vcmp.eq.s32.totalorder %v343, %v448
        %vm451 = vcmp.eq.s32.totalorder %v344, %v448
        %vm452 = vcmp.eq.s32.totalorder %v345, %v448
        %vm453 = vcmp.eq.s32.totalorder %v346, %v448
        %vm454 = vcmp.eq.s32.totalorder %v347, %v448
        %vm455 = vcmp.eq.s32.totalorder %v348, %v448
        %vm456 = vcmp.eq.s32.totalorder %v349, %v448
        %vm457 = vcmp.eq.s32.totalorder %v350, %v448
        %vm458 = vcmp.eq.s32.totalorder %v351, %v448
        %vm459 = vcmp.eq.s32.totalorder %v352, %v448
        %vm460 = vcmp.eq.s32.totalorder %v353, %v448
        %vm461 = vcmp.eq.s32.totalorder %v354, %v448
        %vm462 = vcmp.eq.s32.totalorder %v355, %v448
        %vm463 = vcmp.eq.s32.totalorder %v356, %v448
        %vm464 = vcmp.eq.s32.totalorder %v357, %v448
        %v465 = vsel %vm449, 1, 0
        %v466 = vsel %vm450, 1, 0
        %v467 = vsel %vm451, 1, 0
        %v468 = vsel %vm452, 1, 0
        %v469 = vsel %vm453, 1, 0
        %v470 = vsel %vm454, 1, 0
        %v471 = vsel %vm455, 1, 0
        %v472 = vsel %vm456, 1, 0
        %v473 = vsel %vm457, 1, 0
        %v474 = vsel %vm458, 1, 0
        %v475 = vsel %vm459, 1, 0
        %v476 = vsel %vm460, 1, 0
        %v477 = vsel %vm461, 1, 0
        %v478 = vsel %vm462, 1, 0
        %v479 = vsel %vm463, 1, 0
        %v480 = vsel %vm464, 1, 0
        %v481 = vcvt.s32.f32 %v465
        %v482 = vcvt.s32.f32 %v466
        %v483 = vcvt.s32.f32 %v467
        %v484 = vcvt.s32.f32 %v468
        %v485 = vcvt.s32.f32 %v469
        %v486 = vcvt.s32.f32 %v470
        %v487 = vcvt.s32.f32 %v471
        %v488 = vcvt.s32.f32 %v472
        %v489 = vcvt.s32.f32 %v473
        %v490 = vcvt.s32.f32 %v474
        %v491 = vcvt.s32.f32 %v475
        %v492 = vcvt.s32.f32 %v476
        %v493 = vcvt.s32.f32 %v477
        %v494 = vcvt.s32.f32 %v478
        %v495 = vcvt.s32.f32 %v479
        %v496 = vcvt.s32.f32 %v480
        %v497 = vpack.c.bf16 %v482, %v481
        %v498 = vpack.c.bf16 %v484, %v483
        %v499 = vpack.c.bf16 %v486, %v485
        %v500 = vpack.c.bf16 %v488, %v487
        %v501 = vpack.c.bf16 %v490, %v489
        %v502 = vpack.c.bf16 %v492, %v491
        %v503 = vpack.c.bf16 %v494, %v493
        %v504 = vpack.c.bf16 %v496, %v495
        %505 = vmatpush.bf16.msra.mxu0 %v504
        %506 = vmatpush.bf16.msra.mxu0 %v503
        %507 = vmatpush.bf16.msra.mxu0 %v502
        %508 = vmatpush.bf16.msra.mxu0 %v501
        %509 = vmatpush.bf16.msra.mxu0 %v500
        %510 = vmatpush.bf16.msra.mxu0 %v499
        %511 = vmatpush.bf16.msra.mxu0 %v498
        %512 = vmatpush.bf16.msra.mxu0 %v497
        %513 = vmatmul.bf16.gmra.mxu0 %v424
        %v514 = vpop.f32.mrf.mxu0
        %v515 = vadd.f32 0.0, %v514
        %v516 = vpop.f32.mrf.mxu0
        %v517 = vadd.f32 0.0, %v516
        %518 = vmatmul.bf16.gmra.mxu0 %v425
        %v519 = vpop.f32.mrf.mxu0
        %v520 = vadd.f32 0.0, %v519
        %v521 = vpop.f32.mrf.mxu0
        %v522 = vadd.f32 0.0, %v521
        %523 = vdwg.mxu0
        %v524 = vmax.f32 %v438, %v515
        %v525 = vmax.f32 %v440, %v517
        %v526 = vmax.f32 %v443, %v520
        %v527 = vmax.f32 %v445, %v522
        %v528 = vld [vmem:[%s232 + $0x2] sm:$0x1]
        %v529 = vperm.slane %v528, 0
        %vm530 = vcmp.eq.s32.totalorder %v342, %v529
        %vm531 = vcmp.eq.s32.totalorder %v343, %v529
        %vm532 = vcmp.eq.s32.totalorder %v344, %v529
        %vm533 = vcmp.eq.s32.totalorder %v345, %v529
        %vm534 = vcmp.eq.s32.totalorder %v346, %v529
        %vm535 = vcmp.eq.s32.totalorder %v347, %v529
        %vm536 = vcmp.eq.s32.totalorder %v348, %v529
        %vm537 = vcmp.eq.s32.totalorder %v349, %v529
        %vm538 = vcmp.eq.s32.totalorder %v350, %v529
        %vm539 = vcmp.eq.s32.totalorder %v351, %v529
        %vm540 = vcmp.eq.s32.totalorder %v352, %v529
        %vm541 = vcmp.eq.s32.totalorder %v353, %v529
        %vm542 = vcmp.eq.s32.totalorder %v354, %v529
        %vm543 = vcmp.eq.s32.totalorder %v355, %v529
        %vm544 = vcmp.eq.s32.totalorder %v356, %v529
        %vm545 = vcmp.eq.s32.totalorder %v357, %v529
        %v546 = vsel %vm530, 1, 0
        %v547 = vsel %vm531, 1, 0
        %v548 = vsel %vm532, 1, 0
        %v549 = vsel %vm533, 1, 0
        %v550 = vsel %vm534, 1, 0
        %v551 = vsel %vm535, 1, 0
        %v552 = vsel %vm536, 1, 0
        %v553 = vsel %vm537, 1, 0
        %v554 = vsel %vm538, 1, 0
        %v555 = vsel %vm539, 1, 0
        %v556 = vsel %vm540, 1, 0
        %v557 = vsel %vm541, 1, 0
        %v558 = vsel %vm542, 1, 0
        %v559 = vsel %vm543, 1, 0
        %v560 = vsel %vm544, 1, 0
        %v561 = vsel %vm545, 1, 0
        %v562 = vcvt.s32.f32 %v546
        %v563 = vcvt.s32.f32 %v547
        %v564 = vcvt.s32.f32 %v548
        %v565 = vcvt.s32.f32 %v549
        %v566 = vcvt.s32.f32 %v550
        %v567 = vcvt.s32.f32 %v551
        %v568 = vcvt.s32.f32 %v552
        %v569 = vcvt.s32.f32 %v553
        %v570 = vcvt.s32.f32 %v554
        %v571 = vcvt.s32.f32 %v555
        %v572 = vcvt.s32.f32 %v556
        %v573 = vcvt.s32.f32 %v557
        %v574 = vcvt.s32.f32 %v558
        %v575 = vcvt.s32.f32 %v559
        %v576 = vcvt.s32.f32 %v560
        %v577 = vcvt.s32.f32 %v561
        %v578 = vpack.c.bf16 %v563, %v562
        %v579 = vpack.c.bf16 %v565, %v564
        %v580 = vpack.c.bf16 %v567, %v566
        %v581 = vpack.c.bf16 %v569, %v568
        %v582 = vpack.c.bf16 %v571, %v570
        %v583 = vpack.c.bf16 %v573, %v572
        %v584 = vpack.c.bf16 %v575, %v574
        %v585 = vpack.c.bf16 %v577, %v576
        %586 = vmatpush.bf16.msra.mxu0 %v585
        %587 = vmatpush.bf16.msra.mxu0 %v584
        %588 = vmatpush.bf16.msra.mxu0 %v583
        %589 = vmatpush.bf16.msra.mxu0 %v582
        %590 = vmatpush.bf16.msra.mxu0 %v581
        %591 = vmatpush.bf16.msra.mxu0 %v580
        %592 = vmatpush.bf16.msra.mxu0 %v579
        %593 = vmatpush.bf16.msra.mxu0 %v578
        %594 = vmatmul.bf16.gmra.mxu0 %v424
        %v595 = vpop.f32.mrf.mxu0
        %v596 = vadd.f32 0.0, %v595
        %v597 = vpop.f32.mrf.mxu0
        %v598 = vadd.f32 0.0, %v597
        %599 = vmatmul.bf16.gmra.mxu0 %v425
        %v600 = vpop.f32.mrf.mxu0
        %v601 = vadd.f32 0.0, %v600
        %v602 = vpop.f32.mrf.mxu0
        %v603 = vadd.f32 0.0, %v602
        %604 = vdwg.mxu0
        %v605 = vmax.f32 %v524, %v596
        %v606 = vmax.f32 %v525, %v598
        %v607 = vmax.f32 %v526, %v601
        %v608 = vmax.f32 %v527, %v603
        %v609 = vld [vmem:[%s232 + $0x3] sm:$0x1]
        %v610 = vperm.slane %v609, 0
        %vm611 = vcmp.eq.s32.totalorder %v342, %v610
        %vm612 = vcmp.eq.s32.totalorder %v343, %v610
        %vm613 = vcmp.eq.s32.totalorder %v344, %v610
        %vm614 = vcmp.eq.s32.totalorder %v345, %v610
        %vm615 = vcmp.eq.s32.totalorder %v346, %v610
        %vm616 = vcmp.eq.s32.totalorder %v347, %v610
        %vm617 = vcmp.eq.s32.totalorder %v348, %v610
        %vm618 = vcmp.eq.s32.totalorder %v349, %v610
        %vm619 = vcmp.eq.s32.totalorder %v350, %v610
        %vm620 = vcmp.eq.s32.totalorder %v351, %v610
        %vm621 = vcmp.eq.s32.totalorder %v352, %v610
        %vm622 = vcmp.eq.s32.totalorder %v353, %v610
        %vm623 = vcmp.eq.s32.totalorder %v354, %v610
        %vm624 = vcmp.eq.s32.totalorder %v355, %v610
        %vm625 = vcmp.eq.s32.totalorder %v356, %v610
        %vm626 = vcmp.eq.s32.totalorder %v357, %v610
        %v627 = vsel %vm611, 1, 0
        %v628 = vsel %vm612, 1, 0
        %v629 = vsel %vm613, 1, 0
        %v630 = vsel %vm614, 1, 0
        %v631 = vsel %vm615, 1, 0
        %v632 = vsel %vm616, 1, 0
        %v633 = vsel %vm617, 1, 0
        %v634 = vsel %vm618, 1, 0
        %v635 = vsel %vm619, 1, 0
        %v636 = vsel %vm620, 1, 0
        %v637 = vsel %vm621, 1, 0
        %v638 = vsel %vm622, 1, 0
        %v639 = vsel %vm623, 1, 0
        %v640 = vsel %vm624, 1, 0
        %v641 = vsel %vm625, 1, 0
        %v642 = vsel %vm626, 1, 0
        %v643 = vcvt.s32.f32 %v627
        %v644 = vcvt.s32.f32 %v628
        %v645 = vcvt.s32.f32 %v629
        %v646 = vcvt.s32.f32 %v630
        %v647 = vcvt.s32.f32 %v631
        %v648 = vcvt.s32.f32 %v632
        %v649 = vcvt.s32.f32 %v633
        %v650 = vcvt.s32.f32 %v634
        %v651 = vcvt.s32.f32 %v635
        %v652 = vcvt.s32.f32 %v636
        %v653 = vcvt.s32.f32 %v637
        %v654 = vcvt.s32.f32 %v638
        %v655 = vcvt.s32.f32 %v639
        %v656 = vcvt.s32.f32 %v640
        %v657 = vcvt.s32.f32 %v641
        %v658 = vcvt.s32.f32 %v642
        %v659 = vpack.c.bf16 %v644, %v643
        %v660 = vpack.c.bf16 %v646, %v645
        %v661 = vpack.c.bf16 %v648, %v647
        %v662 = vpack.c.bf16 %v650, %v649
        %v663 = vpack.c.bf16 %v652, %v651
        %v664 = vpack.c.bf16 %v654, %v653
        %v665 = vpack.c.bf16 %v656, %v655
        %v666 = vpack.c.bf16 %v658, %v657
        %667 = vmatpush.bf16.msra.mxu0 %v666
        %668 = vmatpush.bf16.msra.mxu0 %v665
        %669 = vmatpush.bf16.msra.mxu0 %v664
        %670 = vmatpush.bf16.msra.mxu0 %v663
        %671 = vmatpush.bf16.msra.mxu0 %v662
        %672 = vmatpush.bf16.msra.mxu0 %v661
        %673 = vmatpush.bf16.msra.mxu0 %v660
        %674 = vmatpush.bf16.msra.mxu0 %v659
        %675 = vmatmul.bf16.gmra.mxu0 %v424
        %v676 = vpop.f32.mrf.mxu0
        %v677 = vadd.f32 0.0, %v676
        %v678 = vpop.f32.mrf.mxu0
        %v679 = vadd.f32 0.0, %v678
        %680 = vmatmul.bf16.gmra.mxu0 %v425
        %v681 = vpop.f32.mrf.mxu0
        %v682 = vadd.f32 0.0, %v681
        %v683 = vpop.f32.mrf.mxu0
        %v684 = vadd.f32 0.0, %v683
        %685 = vdwg.mxu0
        %v686 = vmax.f32 %v605, %v677
        %v687 = vmax.f32 %v606, %v679
        %v688 = vmax.f32 %v607, %v682
        %v689 = vmax.f32 %v608, %v684
        %v690 = vld [vmem:[%s232 + $0x4] sm:$0x1]
        %v691 = vperm.slane %v690, 0
        %vm692 = vcmp.eq.s32.totalorder %v342, %v691
        %vm693 = vcmp.eq.s32.totalorder %v343, %v691
        %vm694 = vcmp.eq.s32.totalorder %v344, %v691
        %vm695 = vcmp.eq.s32.totalorder %v345, %v691
        %vm696 = vcmp.eq.s32.totalorder %v346, %v691
        %vm697 = vcmp.eq.s32.totalorder %v347, %v691
        %vm698 = vcmp.eq.s32.totalorder %v348, %v691
        %vm699 = vcmp.eq.s32.totalorder %v349, %v691
        %vm700 = vcmp.eq.s32.totalorder %v350, %v691
        %vm701 = vcmp.eq.s32.totalorder %v351, %v691
        %vm702 = vcmp.eq.s32.totalorder %v352, %v691
        %vm703 = vcmp.eq.s32.totalorder %v353, %v691
        %vm704 = vcmp.eq.s32.totalorder %v354, %v691
        %vm705 = vcmp.eq.s32.totalorder %v355, %v691
        %vm706 = vcmp.eq.s32.totalorder %v356, %v691
        %vm707 = vcmp.eq.s32.totalorder %v357, %v691
        %v708 = vsel %vm692, 1, 0
        %v709 = vsel %vm693, 1, 0
        %v710 = vsel %vm694, 1, 0
        %v711 = vsel %vm695, 1, 0
        %v712 = vsel %vm696, 1, 0
        %v713 = vsel %vm697, 1, 0
        %v714 = vsel %vm698, 1, 0
        %v715 = vsel %vm699, 1, 0
        %v716 = vsel %vm700, 1, 0
        %v717 = vsel %vm701, 1, 0
        %v718 = vsel %vm702, 1, 0
        %v719 = vsel %vm703, 1, 0
        %v720 = vsel %vm704, 1, 0
        %v721 = vsel %vm705, 1, 0
        %v722 = vsel %vm706, 1, 0
        %v723 = vsel %vm707, 1, 0
        %v724 = vcvt.s32.f32 %v708
        %v725 = vcvt.s32.f32 %v709
        %v726 = vcvt.s32.f32 %v710
        %v727 = vcvt.s32.f32 %v711
        %v728 = vcvt.s32.f32 %v712
        %v729 = vcvt.s32.f32 %v713
        %v730 = vcvt.s32.f32 %v714
        %v731 = vcvt.s32.f32 %v715
        %v732 = vcvt.s32.f32 %v716
        %v733 = vcvt.s32.f32 %v717
        %v734 = vcvt.s32.f32 %v718
        %v735 = vcvt.s32.f32 %v719
        %v736 = vcvt.s32.f32 %v720
        %v737 = vcvt.s32.f32 %v721
        %v738 = vcvt.s32.f32 %v722
        %v739 = vcvt.s32.f32 %v723
        %v740 = vpack.c.bf16 %v725, %v724
        %v741 = vpack.c.bf16 %v727, %v726
        %v742 = vpack.c.bf16 %v729, %v728
        %v743 = vpack.c.bf16 %v731, %v730
        %v744 = vpack.c.bf16 %v733, %v732
        %v745 = vpack.c.bf16 %v735, %v734
        %v746 = vpack.c.bf16 %v737, %v736
        %v747 = vpack.c.bf16 %v739, %v738
        %748 = vmatpush.bf16.msra.mxu0 %v747
        %749 = vmatpush.bf16.msra.mxu0 %v746
        %750 = vmatpush.bf16.msra.mxu0 %v745
        %751 = vmatpush.bf16.msra.mxu0 %v744
        %752 = vmatpush.bf16.msra.mxu0 %v743
        %753 = vmatpush.bf16.msra.mxu0 %v742
        %754 = vmatpush.bf16.msra.mxu0 %v741
        %755 = vmatpush.bf16.msra.mxu0 %v740
        %756 = vmatmul.bf16.gmra.mxu0 %v424
        %v757 = vpop.f32.mrf.mxu0
        %v758 = vadd.f32 0.0, %v757
        %v759 = vpop.f32.mrf.mxu0
        %v760 = vadd.f32 0.0, %v759
        %761 = vmatmul.bf16.gmra.mxu0 %v425
        %v762 = vpop.f32.mrf.mxu0
        %v763 = vadd.f32 0.0, %v762
        %v764 = vpop.f32.mrf.mxu0
        %v765 = vadd.f32 0.0, %v764
        %766 = vdwg.mxu0
        %v767 = vmax.f32 %v686, %v758
        %v768 = vmax.f32 %v687, %v760
        %v769 = vmax.f32 %v688, %v763
        %v770 = vmax.f32 %v689, %v765
        %v771 = vld [vmem:[%s232 + $0x5] sm:$0x1]
        %v772 = vperm.slane %v771, 0
        %vm773 = vcmp.eq.s32.totalorder %v342, %v772
        %vm774 = vcmp.eq.s32.totalorder %v343, %v772
        %vm775 = vcmp.eq.s32.totalorder %v344, %v772
        %vm776 = vcmp.eq.s32.totalorder %v345, %v772
        %vm777 = vcmp.eq.s32.totalorder %v346, %v772
        %vm778 = vcmp.eq.s32.totalorder %v347, %v772
        %vm779 = vcmp.eq.s32.totalorder %v348, %v772
        %vm780 = vcmp.eq.s32.totalorder %v349, %v772
        %vm781 = vcmp.eq.s32.totalorder %v350, %v772
        %vm782 = vcmp.eq.s32.totalorder %v351, %v772
        %vm783 = vcmp.eq.s32.totalorder %v352, %v772
        %vm784 = vcmp.eq.s32.totalorder %v353, %v772
        %vm785 = vcmp.eq.s32.totalorder %v354, %v772
        %vm786 = vcmp.eq.s32.totalorder %v355, %v772
        %vm787 = vcmp.eq.s32.totalorder %v356, %v772
        %vm788 = vcmp.eq.s32.totalorder %v357, %v772
        %v789 = vsel %vm773, 1, 0
        %v790 = vsel %vm774, 1, 0
        %v791 = vsel %vm775, 1, 0
        %v792 = vsel %vm776, 1, 0
        %v793 = vsel %vm777, 1, 0
        %v794 = vsel %vm778, 1, 0
        %v795 = vsel %vm779, 1, 0
        %v796 = vsel %vm780, 1, 0
        %v797 = vsel %vm781, 1, 0
        %v798 = vsel %vm782, 1, 0
        %v799 = vsel %vm783, 1, 0
        %v800 = vsel %vm784, 1, 0
        %v801 = vsel %vm785, 1, 0
        %v802 = vsel %vm786, 1, 0
        %v803 = vsel %vm787, 1, 0
        %v804 = vsel %vm788, 1, 0
        %v805 = vcvt.s32.f32 %v789
        %v806 = vcvt.s32.f32 %v790
        %v807 = vcvt.s32.f32 %v791
        %v808 = vcvt.s32.f32 %v792
        %v809 = vcvt.s32.f32 %v793
        %v810 = vcvt.s32.f32 %v794
        %v811 = vcvt.s32.f32 %v795
        %v812 = vcvt.s32.f32 %v796
        %v813 = vcvt.s32.f32 %v797
        %v814 = vcvt.s32.f32 %v798
        %v815 = vcvt.s32.f32 %v799
        %v816 = vcvt.s32.f32 %v800
        %v817 = vcvt.s32.f32 %v801
        %v818 = vcvt.s32.f32 %v802
        %v819 = vcvt.s32.f32 %v803
        %v820 = vcvt.s32.f32 %v804
        %v821 = vpack.c.bf16 %v806, %v805
        %v822 = vpack.c.bf16 %v808, %v807
        %v823 = vpack.c.bf16 %v810, %v809
        %v824 = vpack.c.bf16 %v812, %v811
        %v825 = vpack.c.bf16 %v814, %v813
        %v826 = vpack.c.bf16 %v816, %v815
        %v827 = vpack.c.bf16 %v818, %v817
        %v828 = vpack.c.bf16 %v820, %v819
        %829 = vmatpush.bf16.msra.mxu0 %v828
        %830 = vmatpush.bf16.msra.mxu0 %v827
        %831 = vmatpush.bf16.msra.mxu0 %v826
        %832 = vmatpush.bf16.msra.mxu0 %v825
        %833 = vmatpush.bf16.msra.mxu0 %v824
        %834 = vmatpush.bf16.msra.mxu0 %v823
        %835 = vmatpush.bf16.msra.mxu0 %v822
        %836 = vmatpush.bf16.msra.mxu0 %v821
        %837 = vmatmul.bf16.gmra.mxu0 %v424
        %v838 = vpop.f32.mrf.mxu0
        %v839 = vadd.f32 0.0, %v838
        %v840 = vpop.f32.mrf.mxu0
        %v841 = vadd.f32 0.0, %v840
        %842 = vmatmul.bf16.gmra.mxu0 %v425
        %v843 = vpop.f32.mrf.mxu0
        %v844 = vadd.f32 0.0, %v843
        %v845 = vpop.f32.mrf.mxu0
        %v846 = vadd.f32 0.0, %v845
        %847 = vdwg.mxu0
        %v848 = vmax.f32 %v767, %v839
        %v849 = vmax.f32 %v768, %v841
        %v850 = vmax.f32 %v769, %v844
        %v851 = vmax.f32 %v770, %v846
        %v852 = vld [vmem:[%s232 + $0x6] sm:$0x1]
        %v853 = vperm.slane %v852, 0
        %vm854 = vcmp.eq.s32.totalorder %v342, %v853
        %vm855 = vcmp.eq.s32.totalorder %v343, %v853
        %vm856 = vcmp.eq.s32.totalorder %v344, %v853
        %vm857 = vcmp.eq.s32.totalorder %v345, %v853
        %vm858 = vcmp.eq.s32.totalorder %v346, %v853
        %vm859 = vcmp.eq.s32.totalorder %v347, %v853
        %vm860 = vcmp.eq.s32.totalorder %v348, %v853
        %vm861 = vcmp.eq.s32.totalorder %v349, %v853
        %vm862 = vcmp.eq.s32.totalorder %v350, %v853
        %vm863 = vcmp.eq.s32.totalorder %v351, %v853
        %vm864 = vcmp.eq.s32.totalorder %v352, %v853
        %vm865 = vcmp.eq.s32.totalorder %v353, %v853
        %vm866 = vcmp.eq.s32.totalorder %v354, %v853
        %vm867 = vcmp.eq.s32.totalorder %v355, %v853
        %vm868 = vcmp.eq.s32.totalorder %v356, %v853
        %vm869 = vcmp.eq.s32.totalorder %v357, %v853
        %v870 = vsel %vm854, 1, 0
        %v871 = vsel %vm855, 1, 0
        %v872 = vsel %vm856, 1, 0
        %v873 = vsel %vm857, 1, 0
        %v874 = vsel %vm858, 1, 0
        %v875 = vsel %vm859, 1, 0
        %v876 = vsel %vm860, 1, 0
        %v877 = vsel %vm861, 1, 0
        %v878 = vsel %vm862, 1, 0
        %v879 = vsel %vm863, 1, 0
        %v880 = vsel %vm864, 1, 0
        %v881 = vsel %vm865, 1, 0
        %v882 = vsel %vm866, 1, 0
        %v883 = vsel %vm867, 1, 0
        %v884 = vsel %vm868, 1, 0
        %v885 = vsel %vm869, 1, 0
        %v886 = vcvt.s32.f32 %v870
        %v887 = vcvt.s32.f32 %v871
        %v888 = vcvt.s32.f32 %v872
        %v889 = vcvt.s32.f32 %v873
        %v890 = vcvt.s32.f32 %v874
        %v891 = vcvt.s32.f32 %v875
        %v892 = vcvt.s32.f32 %v876
        %v893 = vcvt.s32.f32 %v877
        %v894 = vcvt.s32.f32 %v878
        %v895 = vcvt.s32.f32 %v879
        %v896 = vcvt.s32.f32 %v880
        %v897 = vcvt.s32.f32 %v881
        %v898 = vcvt.s32.f32 %v882
        %v899 = vcvt.s32.f32 %v883
        %v900 = vcvt.s32.f32 %v884
        %v901 = vcvt.s32.f32 %v885
        %v902 = vpack.c.bf16 %v887, %v886
        %v903 = vpack.c.bf16 %v889, %v888
        %v904 = vpack.c.bf16 %v891, %v890
        %v905 = vpack.c.bf16 %v893, %v892
        %v906 = vpack.c.bf16 %v895, %v894
        %v907 = vpack.c.bf16 %v897, %v896
        %v908 = vpack.c.bf16 %v899, %v898
        %v909 = vpack.c.bf16 %v901, %v900
        %910 = vmatpush.bf16.msra.mxu0 %v909
        %911 = vmatpush.bf16.msra.mxu0 %v908
        %912 = vmatpush.bf16.msra.mxu0 %v907
        %913 = vmatpush.bf16.msra.mxu0 %v906
        %914 = vmatpush.bf16.msra.mxu0 %v905
        %915 = vmatpush.bf16.msra.mxu0 %v904
        %916 = vmatpush.bf16.msra.mxu0 %v903
        %917 = vmatpush.bf16.msra.mxu0 %v902
        %918 = vmatmul.bf16.gmra.mxu0 %v424
        %v919 = vpop.f32.mrf.mxu0
        %v920 = vadd.f32 0.0, %v919
        %v921 = vpop.f32.mrf.mxu0
        %v922 = vadd.f32 0.0, %v921
        %923 = vmatmul.bf16.gmra.mxu0 %v425
        %v924 = vpop.f32.mrf.mxu0
        %v925 = vadd.f32 0.0, %v924
        %v926 = vpop.f32.mrf.mxu0
        %v927 = vadd.f32 0.0, %v926
        %928 = vdwg.mxu0
        %v929 = vmax.f32 %v848, %v920
        %v930 = vmax.f32 %v849, %v922
        %v931 = vmax.f32 %v850, %v925
        %v932 = vmax.f32 %v851, %v927
        %v933 = vld [vmem:[%s232 + $0x7] sm:$0x1]
        %v934 = vperm.slane %v933, 0
        %vm935 = vcmp.eq.s32.totalorder %v342, %v934
        %vm936 = vcmp.eq.s32.totalorder %v343, %v934
        %vm937 = vcmp.eq.s32.totalorder %v344, %v934
        %vm938 = vcmp.eq.s32.totalorder %v345, %v934
        %vm939 = vcmp.eq.s32.totalorder %v346, %v934
        %vm940 = vcmp.eq.s32.totalorder %v347, %v934
        %vm941 = vcmp.eq.s32.totalorder %v348, %v934
        %vm942 = vcmp.eq.s32.totalorder %v349, %v934
        %vm943 = vcmp.eq.s32.totalorder %v350, %v934
        %vm944 = vcmp.eq.s32.totalorder %v351, %v934
        %vm945 = vcmp.eq.s32.totalorder %v352, %v934
        %vm946 = vcmp.eq.s32.totalorder %v353, %v934
        %vm947 = vcmp.eq.s32.totalorder %v354, %v934
        %vm948 = vcmp.eq.s32.totalorder %v355, %v934
        %vm949 = vcmp.eq.s32.totalorder %v356, %v934
        %vm950 = vcmp.eq.s32.totalorder %v357, %v934
        %v951 = vsel %vm935, 1, 0
        %v952 = vsel %vm936, 1, 0
        %v953 = vsel %vm937, 1, 0
        %v954 = vsel %vm938, 1, 0
        %v955 = vsel %vm939, 1, 0
        %v956 = vsel %vm940, 1, 0
        %v957 = vsel %vm941, 1, 0
        %v958 = vsel %vm942, 1, 0
        %v959 = vsel %vm943, 1, 0
        %v960 = vsel %vm944, 1, 0
        %v961 = vsel %vm945, 1, 0
        %v962 = vsel %vm946, 1, 0
        %v963 = vsel %vm947, 1, 0
        %v964 = vsel %vm948, 1, 0
        %v965 = vsel %vm949, 1, 0
        %v966 = vsel %vm950, 1, 0
        %v967 = vcvt.s32.f32 %v951
        %v968 = vcvt.s32.f32 %v952
        %v969 = vcvt.s32.f32 %v953
        %v970 = vcvt.s32.f32 %v954
        %v971 = vcvt.s32.f32 %v955
        %v972 = vcvt.s32.f32 %v956
        %v973 = vcvt.s32.f32 %v957
        %v974 = vcvt.s32.f32 %v958
        %v975 = vcvt.s32.f32 %v959
        %v976 = vcvt.s32.f32 %v960
        %v977 = vcvt.s32.f32 %v961
        %v978 = vcvt.s32.f32 %v962
        %v979 = vcvt.s32.f32 %v963
        %v980 = vcvt.s32.f32 %v964
        %v981 = vcvt.s32.f32 %v965
        %v982 = vcvt.s32.f32 %v966
        %v983 = vpack.c.bf16 %v968, %v967
        %v984 = vpack.c.bf16 %v970, %v969
        %v985 = vpack.c.bf16 %v972, %v971
        %v986 = vpack.c.bf16 %v974, %v973
        %v987 = vpack.c.bf16 %v976, %v975
        %v988 = vpack.c.bf16 %v978, %v977
        %v989 = vpack.c.bf16 %v980, %v979
        %v990 = vpack.c.bf16 %v982, %v981
        %991 = vmatpush.bf16.msra.mxu0 %v990
        %992 = vmatpush.bf16.msra.mxu0 %v989
        %993 = vmatpush.bf16.msra.mxu0 %v988
        %994 = vmatpush.bf16.msra.mxu0 %v987
        %995 = vmatpush.bf16.msra.mxu0 %v986
        %996 = vmatpush.bf16.msra.mxu0 %v985
        %997 = vmatpush.bf16.msra.mxu0 %v984
        %998 = vmatpush.bf16.msra.mxu0 %v983
        %999 = vmatmul.bf16.gmra.mxu0 %v424
        %v1000 = vpop.f32.mrf.mxu0
        %v1001 = vadd.f32 0.0, %v1000
        %v1002 = vpop.f32.mrf.mxu0
        %v1003 = vadd.f32 0.0, %v1002
        %1004 = vmatmul.bf16.gmra.mxu0 %v425
        %v1005 = vpop.f32.mrf.mxu0
        %v1006 = vadd.f32 0.0, %v1005
        %v1007 = vpop.f32.mrf.mxu0
        %v1008 = vadd.f32 0.0, %v1007
        %1009 = vdwg.mxu0
        %v1010 = vmax.f32 %v929, %v1001
        %v1011 = vmax.f32 %v930, %v1003
        %v1012 = vmax.f32 %v931, %v1006
        %v1013 = vmax.f32 %v932, %v1008
        %s1014 = smul.u32 %s23, 128
        %s1015 = sshra.s32 %s1014, 7
        %s1016 = sand.u32 %s1014, 127
        %s1017 = smul.addr %s1015, 4
        %s1018 = scalar_lea.vmem [#allocation2], %s1017
        %v1019 = vld [vmem:[%s1018] sm:$0xf]
        %v1020 = vld [vmem:[%s1018 + $0x4] sm:$0xf]
        %v1021 = vld [vmem:[%s1018 + $0x8] sm:$0xf]
        %v1022 = vld [vmem:[%s1018 + $0xc] sm:$0xf]
        %v1023 = vunpack.c.l.bf16 %v1019
        %v1024 = vunpack.c.l.bf16 %v1020
        %v1025 = vunpack.c.l.bf16 %v1021
        %v1026 = vunpack.c.l.bf16 %v1022
        %v1027 = vadd.f32 %v1010, %v1023
        %v1028 = vadd.f32 %v1011, %v1024
        %v1029 = vadd.f32 %v1012, %v1025
        %v1030 = vadd.f32 %v1013, %v1026
        %v1031 = vld [vmem:[%s3] sm:$0xff]
        %v1032 = vld [vmem:[%s3 + $0x8] sm:$0xff]
        %v1033 = vld [vmem:[%s3 + $0x10] sm:$0xff]
        %v1034 = vld [vmem:[%s3 + $0x18] sm:$0xff]
        %1036 = vset.pattern.permute.xlu0 0
        %1037 = vperm.xlu0 %1036, %v1031
        %v1038 = vpop.permute.xlu0 %1037
        %1041 = vset.pattern.permute.xlu0 0
        %1042 = vperm.xlu0 %1041, %v1032
        %v1043 = vpop.permute.xlu0 %1042
        %1046 = vset.pattern.permute.xlu0 0
        %1047 = vperm.xlu0 %1046, %v1033
        %v1048 = vpop.permute.xlu0 %1047
        %1051 = vset.pattern.permute.xlu0 0
        %1052 = vperm.xlu0 %1051, %v1034
        %v1053 = vpop.permute.xlu0 %1052
        %v1055 = vadd.f32 %v1027, %v1038
        %v1056 = vadd.f32 %v1028, %v1043
        %v1057 = vadd.f32 %v1029, %v1048
        %v1058 = vadd.f32 %v1030, %v1053
        %v1059 = vmax.f32 %v1055, 0.0
        %v1060 = vmax.f32 %v1056, 0.0
        %v1061 = vmax.f32 %v1057, 0.0
        %v1062 = vmax.f32 %v1058, 0.0
        %1063 = vst [vmem:[%s225] sm:$0xff] %v1059
        %1064 = vst [vmem:[%s225 + $0x8] sm:$0xff] %v1060
        %1065 = vst [vmem:[%s225 + $0x10] sm:$0xff] %v1061
        %1066 = vst [vmem:[%s225 + $0x18] sm:$0xff] %v1062
        %s1067 = sand.u32 %s136, 1
        %s1068 = scalar_lea.sflag [#allocation4], %s1067
        %s1069 = sand.u32 %s136, 1
        %s1070 = smul.addr %s1069, 32
        %s1071 = scalar_lea.vmem [#allocation3], %s1070
        // Predicated region
        $region41: #{tpu_custom_call.1} parent=35 // pred_check
          %p1072 = pneg %p146
        $region42: #{tpu_custom_call.1} parent=35 // pred_check_branch
          %1074 = sbr.rel (%p1072) target = $region44
        $region43: #{tpu_custom_call.1} parent=35 // pred_region
          %1076 = vsyncadd %s1068, 0
          %s1077 = smul.addr %s22, 4
          %s1078 = sadd.s32 %s23, %s1077
          %s1079 = smul.addr %s1078, 8
          %s1080 = scalar_lea.hbm %s4, %s1079
          %s1081 = sshll.u32 %s1071, 4
          %s1082 = int_to_ptr.vmem [resolvable:$true] %s1081
          %s1083 = sshll.u32 %s1080, 4
          %s1084 = int_to_ptr.hbm [resolvable:$true] %s1083
          %1089 = dma.vmem_to_hbm [thread:$0]  %s1082, 512, %s1084, %s1068, 128, 128, 8
        $region44: #{tpu_custom_call.1} parent=35 // pred_fallthru
          _
      $region36: #{tpu_custom_call.1} parent=5 // pred_fallthru
        _
      %p1090 = scmp.le.s32.totalorder 2, %s13
      // Predicated region
      $region45: #{tpu_custom_call.1} parent=5 // pred_check
        %p1091 = pneg %p1090
      $region46: #{tpu_custom_call.1} parent=5 // pred_check_branch
        %1093 = sbr.rel (%p1091) target = $region48
      $region47: #{tpu_custom_call.1} parent=5 // pred_region
        %s1094 = ssub.s32 %s13, 2
        // Predicated region
        $region49: #{tpu_custom_call.1} parent=47 // pred_check
          %p1095 = pneg %p152
        $region50: #{tpu_custom_call.1} parent=47 // pred_check_branch
          %1097 = sbr.rel (%p1095) target = $region52
        $region51: #{tpu_custom_call.1} parent=47 // pred_region
          %s1098 = sand.u32 %s137, 1
          %s1099 = scalar_lea.sflag [#allocation4], %s1098
          %s1100 = sand.u32 %s137, 1
          %s1101 = smul.addr %s1100, 32
          %s1102 = scalar_lea.vmem [#allocation3], %s1101
          %1104 = dma.done %s1099, 512
        $region52: #{tpu_custom_call.1} parent=47 // pred_fallthru
          _
      $region48: #{tpu_custom_call.1} parent=5 // pred_fallthru
        _
    $region6: #{tpu_custom_call.1} parent=1 // loop_footer
      %s17 = sadd.s32 1, %s13
    $region7: #{tpu_custom_call.1} parent=1 // loop_footer_branch
      %12 = sbr.rel target = $region3
    $region8: #{tpu_custom_call.1} parent=1 // loop_exit
      _
    %1105 = vsyncpa [#allocation4], 1
    %s1106 = scalar_lea.sflag [#allocation4], 1
    %1107 = vsyncpa %s1106, 1

</llo_original>
